<compile_context>
chip_gen: v7x
topology: tpu7x:2x2x1
jax: 0.10.0
libtpu: 0.0.40
codegen_flags: <defaults>
</compile_context>

<pallas_src>
import functools

import jax
import jax.numpy as jnp
import numpy as np
from jax.experimental import pallas as pl
from jax.experimental.pallas import tpu as pltpu

EPS = 1e-5


# --------------------------------------------------------------------------
# Fused kernel: conv3x3(SAME) + bias + BatchNorm (batch stats) + ReLU
# --------------------------------------------------------------------------
def _unit_kernel(x_ref, t_ref, b_ref, g_ref, beta_ref, m_ref, o_ref, xpad_ref,
                 *, N, H, W, Cin, Cout):
    # ---- zero-pad the H axis inside VMEM (absorbs the XLA pad op) ---------
    xpad_ref[...] = jnp.zeros_like(xpad_ref)            # (N, H+2, W*Cin)
    xpad_ref[:, 1:H + 1, :] = x_ref[...]                # interior rows

    # ---- conv: bias folded into the accumulator init, 3 MXU pushes --------
    acc = jnp.broadcast_to(b_ref[...], (N * H, W * Cout))   # (32, 128)
    for dh in range(3):                                  # static, unrolled
        slab = xpad_ref[:, dh:dh + H, :].reshape(N * H, W * Cin)   # (32, 64)
        acc = acc + jnp.dot(slab, t_ref[dh],
                            preferred_element_type=jnp.float32)

    # ---- BatchNorm (training-mode biased batch stats) + ReLU --------------
    inv_count = 1.0 / float(N * H * W)
    colsum = jnp.sum(acc, axis=0, keepdims=True)         # (1, W*Cout)
    colsq = jnp.sum(acc * acc, axis=0, keepdims=True)    # (1, W*Cout)
    # m_ref sums over lanes sharing a channel and replicates the result back
    # to every (w, cout) lane, so no reshape/relayout is needed.
    mean = jnp.dot(colsum, m_ref[...],
                   preferred_element_type=jnp.float32) * inv_count
    mean_sq = jnp.dot(colsq, m_ref[...],
                      preferred_element_type=jnp.float32) * inv_count
    var = mean_sq - mean * mean
    inv = jax.lax.rsqrt(var + EPS)
    out = (acc - mean) * (inv * g_ref[...]) + beta_ref[...]
    o_ref[...] = jnp.maximum(out, 0.0)                   # lane-dense store


# --------------------------------------------------------------------------
# Host-side parameter prep (runs once per set of weights)
# --------------------------------------------------------------------------
def prepare_unit_params(w_hwio, bias, gamma, beta, W):
    w_np = np.asarray(w_hwio, dtype=np.float32)          # (3, 3, Cin, Cout)
    Cin, Cout = w_np.shape[2], w_np.shape[3]

    # Block-Toeplitz weight per kernel row dh: (3, W*Cin, W*Cout).
    # out[h, w*Cout+co] += xrow[(w+dw-1)*Cin + c] * w[dh, dw, c, co]
    # Out-of-range (w+dw-1) taps are simply omitted -> SAME zero padding in W.
    T = np.zeros((3, W * Cin, W * Cout), np.float32)
    for dh in range(3):
        for dw in range(3):
            for w in range(W):
                iw = w + dw - 1
                if 0 <= iw < W:
                    T[dh, iw * Cin:(iw + 1) * Cin,
                      w * Cout:(w + 1) * Cout] = w_np[dh, dw]

    # Per-lane (w, cout) tiled affine params: lane = w*Cout + co.
    b_row = np.tile(np.asarray(bias, np.float32), W)[None, :]
    g_row = np.tile(np.asarray(gamma, np.float32), W)[None, :]
    beta_row = np.tile(np.asarray(beta, np.float32), W)[None, :]

    # Channel-spread matrix: (x @ M)[lane] = sum over lanes with same channel.
    lane_ch = np.arange(W * Cout) % Cout
    M = (lane_ch[:, None] == lane_ch[None, :]).astype(np.float32)

    return tuple(jnp.asarray(a) for a in (T, b_row, g_row, beta_row, M))


# --------------------------------------------------------------------------
# Full Unit forward (takes PyTorch-style NCHW input)
# --------------------------------------------------------------------------
def unit_forward(x_nchw, params, Cout):
    T, b_row, g_row, beta_row, M = params
    N, Cin, H, W = x_nchw.shape

    # NCHW -> NHWC -> (N, H, W*Cin); the reshape is free (contiguous).
    x_flat = jnp.transpose(x_nchw, (0, 2, 3, 1)).reshape(N, H, W * Cin)

    kernel = functools.partial(_unit_kernel, N=N, H=H, W=W, Cin=Cin, Cout=Cout)
    out = pl.pallas_call(
        kernel,
        out_shape=jax.ShapeDtypeStruct((N * H, W * Cout), jnp.float32),
        scratch_shapes=[pltpu.VMEM((N, H + 2, W * Cin), jnp.float32)],
    )(x_flat, T, b_row, g_row, beta_row, M)

    # (N*H, W*Cout) -> (N, H, W, Cout) is free; then back to NCHW.
    return jnp.transpose(out.reshape(N, H, W, Cout), (0, 3, 1, 2))


# --------------------------------------------------------------------------
# Pure-JAX reference
# --------------------------------------------------------------------------
def reference_forward(x_nchw, w_hwio, bias, gamma, beta):
    x_nhwc = jnp.transpose(x_nchw, (0, 2, 3, 1))
    dn = jax.lax.conv_dimension_numbers(
        x_nhwc.shape, w_hwio.shape, ("NHWC", "HWIO", "NHWC"))
    y = jax.lax.conv_general_dilated(
        x_nhwc, w_hwio, (1, 1), "SAME", dimension_numbers=dn,
        precision=jax.lax.Precision.HIGHEST) + bias
    mean = jnp.mean(y, axis=(0, 1, 2))
    var = jnp.mean((y - mean) ** 2, axis=(0, 1, 2))
    out = (y - mean) / jnp.sqrt(var + EPS) * gamma + beta
    out = jnp.maximum(out, 0.0)
    return jnp.transpose(out, (0, 3, 1, 2))


if __name__ == "__main__":
    N, Cin, Cout, H, W = 2, 4, 8, 16, 16

    key = jax.random.PRNGKey(0)
    kx, kw, kb = jax.random.split(key, 3)
    x = jax.random.normal(kx, (N, Cin, H, W), dtype=jnp.float32)

    # Deterministic parameter init (shapes from nn.Conv2d / nn.BatchNorm2d).
    w_hwio = 0.1 * jax.random.normal(kw, (3, 3, Cin, Cout), dtype=jnp.float32)
    bias = 0.1 * jax.random.normal(kb, (Cout,), dtype=jnp.float32)
    gamma = jnp.ones((Cout,), dtype=jnp.float32)   # BN weight (PyTorch default)
    beta = jnp.zeros((Cout,), dtype=jnp.float32)   # BN bias   (PyTorch default)

    params = prepare_unit_params(w_hwio, bias, gamma, beta, W)
    out = unit_forward(x, params, Cout)
    out = jax.block_until_ready(out)

    ref = reference_forward(x, w_hwio, bias, gamma, beta)
    np.testing.assert_allclose(np.asarray(out), np.asarray(ref),
                               atol=1e-3, rtol=1e-3)

    print("KERNEL_OK")
</pallas_src>

<mosaic_0001>
module attributes {stable_mosaic.version = 11 : i64} {
  func.func @_unit_kernel(%arg0: memref<2x16x64xf32, #tpu.memory_space<vmem>>, %arg1: memref<3x64x128xf32, #tpu.memory_space<vmem>>, %arg2: memref<1x128xf32, #tpu.memory_space<vmem>>, %arg3: memref<1x128xf32, #tpu.memory_space<vmem>>, %arg4: memref<1x128xf32, #tpu.memory_space<vmem>>, %arg5: memref<128x128xf32, #tpu.memory_space<vmem>>, %arg6: memref<32x128xf32, #tpu.memory_space<vmem>>, %arg7: memref<2x18x64xf32, #tpu.memory_space<vmem>>) attributes {dimension_semantics = [], scalar_prefetch = 0 : i64, scratch_operands = 1 : i64, tpu.core_type = #tpu.core_type<tc>} {
    %cst = arith.constant 0.000000e+00 : f32
    %0 = vector.broadcast %cst : f32 to vector<2x18x64xf32>
    %c0 = arith.constant 0 : index
    %c0_0 = arith.constant 0 : index
    %c0_1 = arith.constant 0 : index
    %1 = vector.load %arg7[%c0, %c0_0, %c0_1] : memref<2x18x64xf32, #tpu.memory_space<vmem>>, vector<2x18x64xf32>
    tpu.vector_store %arg7[%c0, %c0_0, %c0_1], %0 {strides = array<i32>} : memref<2x18x64xf32, #tpu.memory_space<vmem>>, vector<2x18x64xf32>,
    %c0_2 = arith.constant 0 : index
    %c0_3 = arith.constant 0 : index
    %c0_4 = arith.constant 0 : index
    %2 = vector.load %arg0[%c0_2, %c0_3, %c0_4] : memref<2x16x64xf32, #tpu.memory_space<vmem>>, vector<2x16x64xf32>
    %c0_5 = arith.constant 0 : index
    %c1 = arith.constant 1 : index
    %c0_6 = arith.constant 0 : index
    %3 = vector.load %arg7[%c0_5, %c1, %c0_6] : memref<2x18x64xf32, #tpu.memory_space<vmem>>, vector<2x16x64xf32>
    tpu.vector_store %arg7[%c0_5, %c1, %c0_6], %2 {strides = array<i32>} : memref<2x18x64xf32, #tpu.memory_space<vmem>>, vector<2x16x64xf32>,
    %c0_7 = arith.constant 0 : index
    %c0_8 = arith.constant 0 : index
    %4 = vector.load %arg2[%c0_7, %c0_8] : memref<1x128xf32, #tpu.memory_space<vmem>>, vector<1x128xf32>
    %5 = vector.shape_cast %4 : vector<1x128xf32> to vector<1x128xf32>
    %6 = vector.broadcast %5 : vector<1x128xf32> to vector<32x128xf32>
    %c0_9 = arith.constant 0 : index
    %c0_10 = arith.constant 0 : index
    %c0_11 = arith.constant 0 : index
    %7 = vector.load %arg7[%c0_9, %c0_10, %c0_11] : memref<2x18x64xf32, #tpu.memory_space<vmem>>, vector<2x16x64xf32>
    %8 = vector.shape_cast %7 : vector<2x16x64xf32> to vector<32x64xf32>
    %c0_12 = arith.constant 0 : index
    %c0_13 = arith.constant 0 : index
    %c0_14 = arith.constant 0 : index
    %9 = vector.load %arg1[%c0_12, %c0_13, %c0_14] : memref<3x64x128xf32, #tpu.memory_space<vmem>>, vector<1x64x128xf32>
    %10 = vector.shape_cast %9 : vector<1x64x128xf32> to vector<64x128xf32>
    %cst_15 = arith.constant dense<0.000000e+00> : vector<32x128xf32>
    %11 = tpu.matmul %8, %10, %cst_15 {dimension_numbers = #tpu.dot_dimension_numbers<[1], [0], [0], [1], [0, 0, 1, 1], [], []>} : vector<32x64xf32>, vector<64x128xf32>, vector<32x128xf32> -> vector<32x128xf32>
    %12 = arith.addf %6, %11 : vector<32x128xf32>
    %c0_16 = arith.constant 0 : index
    %c1_17 = arith.constant 1 : index
    %c0_18 = arith.constant 0 : index
    %13 = vector.load %arg7[%c0_16, %c1_17, %c0_18] : memref<2x18x64xf32, #tpu.memory_space<vmem>>, vector<2x16x64xf32>
    %14 = vector.shape_cast %13 : vector<2x16x64xf32> to vector<32x64xf32>
    %c1_19 = arith.constant 1 : index
    %c0_20 = arith.constant 0 : index
    %c0_21 = arith.constant 0 : index
    %15 = vector.load %arg1[%c1_19, %c0_20, %c0_21] : memref<3x64x128xf32, #tpu.memory_space<vmem>>, vector<1x64x128xf32>
    %16 = vector.shape_cast %15 : vector<1x64x128xf32> to vector<64x128xf32>
    %cst_22 = arith.constant dense<0.000000e+00> : vector<32x128xf32>
    %17 = tpu.matmul %14, %16, %cst_22 {dimension_numbers = #tpu.dot_dimension_numbers<[1], [0], [0], [1], [0, 0, 1, 1], [], []>} : vector<32x64xf32>, vector<64x128xf32>, vector<32x128xf32> -> vector<32x128xf32>
    %18 = arith.addf %12, %17 : vector<32x128xf32>
    %c0_23 = arith.constant 0 : index
    %c2 = arith.constant 2 : index
    %c0_24 = arith.constant 0 : index
    %19 = vector.load %arg7[%c0_23, %c2, %c0_24] : memref<2x18x64xf32, #tpu.memory_space<vmem>>, vector<2x16x64xf32>
    %20 = vector.shape_cast %19 : vector<2x16x64xf32> to vector<32x64xf32>
    %c2_25 = arith.constant 2 : index
    %c0_26 = arith.constant 0 : index
    %c0_27 = arith.constant 0 : index
    %21 = vector.load %arg1[%c2_25, %c0_26, %c0_27] : memref<3x64x128xf32, #tpu.memory_space<vmem>>, vector<1x64x128xf32>
    %22 = vector.shape_cast %21 : vector<1x64x128xf32> to vector<64x128xf32>
    %cst_28 = arith.constant dense<0.000000e+00> : vector<32x128xf32>
    %23 = tpu.matmul %20, %22, %cst_28 {dimension_numbers = #tpu.dot_dimension_numbers<[1], [0], [0], [1], [0, 0, 1, 1], [], []>} : vector<32x64xf32>, vector<64x128xf32>, vector<32x128xf32> -> vector<32x128xf32>
    %24 = arith.addf %18, %23 : vector<32x128xf32>
    %cst_29 = arith.constant dense<0.000000e+00> : vector<128xf32>
    %25 = vector.multi_reduction <add>, %24, %cst_29 [0] : vector<32x128xf32> to vector<128xf32>
    %26 = vector.shape_cast %25 : vector<128xf32> to vector<1x128xf32>
    %27 = arith.mulf %24, %24 : vector<32x128xf32>
    %cst_30 = arith.constant dense<0.000000e+00> : vector<128xf32>
    %28 = vector.multi_reduction <add>, %27, %cst_30 [0] : vector<32x128xf32> to vector<128xf32>
    %29 = vector.shape_cast %28 : vector<128xf32> to vector<1x128xf32>
    %c0_31 = arith.constant 0 : index
    %c0_32 = arith.constant 0 : index
    %30 = vector.load %arg5[%c0_31, %c0_32] : memref<128x128xf32, #tpu.memory_space<vmem>>, vector<128x128xf32>
    %cst_33 = arith.constant dense<0.000000e+00> : vector<1x128xf32>
    %31 = tpu.matmul %26, %30, %cst_33 {dimension_numbers = #tpu.dot_dimension_numbers<[1], [0], [0], [1], [0, 0, 1, 1], [], []>} : vector<1x128xf32>, vector<128x128xf32>, vector<1x128xf32> -> vector<1x128xf32>
    %cst_34 = arith.constant 0.001953125 : f32
    %32 = vector.broadcast %cst_34 : f32 to vector<1x128xf32>
    %33 = arith.mulf %31, %32 : vector<1x128xf32>
    %c0_35 = arith.constant 0 : index
    %c0_36 = arith.constant 0 : index
    %34 = vector.load %arg5[%c0_35, %c0_36] : memref<128x128xf32, #tpu.memory_space<vmem>>, vector<128x128xf32>
    %cst_37 = arith.constant dense<0.000000e+00> : vector<1x128xf32>
    %35 = tpu.matmul %29, %34, %cst_37 {dimension_numbers = #tpu.dot_dimension_numbers<[1], [0], [0], [1], [0, 0, 1, 1], [], []>} : vector<1x128xf32>, vector<128x128xf32>, vector<1x128xf32> -> vector<1x128xf32>
    %cst_38 = arith.constant 0.001953125 : f32
    %36 = vector.broadcast %cst_38 : f32 to vector<1x128xf32>
    %37 = arith.mulf %35, %36 : vector<1x128xf32>
    %38 = arith.mulf %33, %33 : vector<1x128xf32>
    %39 = arith.subf %37, %38 : vector<1x128xf32>
    %cst_39 = arith.constant 9.99999974E-6 : f32
    %40 = vector.broadcast %cst_39 : f32 to vector<1x128xf32>
    %41 = arith.addf %39, %40 : vector<1x128xf32>
    %42 = math.rsqrt %41 : vector<1x128xf32>
    %43 = vector.broadcast %33 : vector<1x128xf32> to vector<32x128xf32>
    %44 = arith.subf %24, %43 : vector<32x128xf32>
    %c0_40 = arith.constant 0 : index
    %c0_41 = arith.constant 0 : index
    %45 = vector.load %arg3[%c0_40, %c0_41] : memref<1x128xf32, #tpu.memory_space<vmem>>, vector<1x128xf32>
    %46 = arith.mulf %42, %45 : vector<1x128xf32>
    %47 = vector.broadcast %46 : vector<1x128xf32> to vector<32x128xf32>
    %48 = arith.mulf %44, %47 : vector<32x128xf32>
    %c0_42 = arith.constant 0 : index
    %c0_43 = arith.constant 0 : index
    %49 = vector.load %arg4[%c0_42, %c0_43] : memref<1x128xf32, #tpu.memory_space<vmem>>, vector<1x128xf32>
    %50 = vector.broadcast %49 : vector<1x128xf32> to vector<32x128xf32>
    %51 = arith.addf %48, %50 : vector<32x128xf32>
    %cst_44 = arith.constant 0.000000e+00 : f32
    %52 = vector.broadcast %cst_44 : f32 to vector<32x128xf32>
    %53 = arith.maximumf %51, %52 : vector<32x128xf32>
    %c0_45 = arith.constant 0 : index
    %c0_46 = arith.constant 0 : index
    %54 = vector.load %arg6[%c0_45, %c0_46] : memref<32x128xf32, #tpu.memory_space<vmem>>, vector<32x128xf32>
    tpu.vector_store %arg6[%c0_45, %c0_46], %53 {strides = array<i32>} : memref<32x128xf32, #tpu.memory_space<vmem>>, vector<32x128xf32>,
    return
  }
}

</mosaic_0001>

<llo_original>
// kernel: tpu_custom_call.1
$region0: #{tpu_custom_call.1}
  #allocation0 [shape = 'u32[]', space=smem, size = 0x4, offset = 0x4, fixed_abs, tag = 'smem constant byte address 0x4 - core index']
  #allocation1 [shape = 'u32[144,128]{1,0:T(1,128)}', space=vmem, size = 0x12000, scoped, tag = 'internal scratch']
  #allocation2 [shape = 'f32[2,18,64]{2,1,0:T(8,128)}', space=vmem, size = 0x6000, scoped, tag = 'scratch operand']
  %s0 = inlined_call_operand.hbm [shape: f32[2,16,64], index: 0, kind: input, shape index: {}]
  %s1 = inlined_call_operand.hbm [shape: f32[3,64,128], index: 1, kind: input, shape index: {}]
  %s2 = inlined_call_operand.vmem [shape: f32[1,128], index: 2, kind: input, shape index: {}]
  %s3 = inlined_call_operand.vmem [shape: f32[1,128], index: 3, kind: input, shape index: {}]
  %s4 = inlined_call_operand.vmem [shape: f32[1,128], index: 4, kind: input, shape index: {}]
  %s5 = inlined_call_operand.hbm [shape: f32[128,128], index: 5, kind: input, shape index: {}]
  %s6 = inlined_call_operand.hbm [shape: f32[32,128], index: 6, kind: output, shape index: {}]
  %s7 = sld [smem:[#allocation0]]
  $region46: #{tpu_custom_call.1} parent=0
    _
  %s9 = ssub.s32 1, %s7
  %s10 = scalar_select 0, %s9, %s7
  $region1: #{tpu_custom_call.1} parent=0
    #allocation3 [shape = 'u8[16384]{0}', space=vmem, size = 0x4000, scoped, tag = 'input window, operand 0, single buffered']
    #allocation4 [shape = 's32[1]{0}', space=sflag, size = 0x4, scoped, tag = 'scoped memory for tpu_custom_call.1']
    #allocation5 [shape = 's32[1]{0}', space=sflag, size = 0x4, scoped, tag = 'scoped memory for tpu_custom_call.1']
    #allocation6 [shape = 'u8[98304]{0}', space=vmem, size = 0x18000, scoped, tag = 'input window, operand 1, single buffered']
    #allocation7 [shape = 's32[1]{0}', space=sflag, size = 0x4, scoped, tag = 'scoped memory for tpu_custom_call.1']
    #allocation8 [shape = 'u8[65536]{0}', space=vmem, size = 0x10000, scoped, tag = 'input window, operand 5, single buffered']
    #allocation9 [shape = 'u8[16384]{0}', space=vmem, size = 0x4000, scoped, tag = 'output window, operand 0, single buffered']
    %11 = vsyncpa [#allocation4], 0
    %12 = vsyncpa [#allocation7], 0
    %13 = vsyncpa [#allocation5], 0
    // Predicated region
    $region2: #{tpu_custom_call.1} parent=1 // pred_check
      _
    $region3: #{tpu_custom_call.1} parent=1 // pred_check_branch
      %15 = sbr.rel (0) target = $region5
    $region4: #{tpu_custom_call.1} parent=1 // pred_region
      %s17 = ssub.s32 512, 512
      %18 = vsyncadd [#allocation4], %s17
      %s19 = sshll.u32 [#allocation3], 4
      %s20 = int_to_ptr.vmem [resolvable:$true] %s19
      %25 = dma.hbm_to_vmem [thread:$0]  %s0, 512, %s20, [#allocation4], 128, 128, 8
    $region5: #{tpu_custom_call.1} parent=1 // pred_fallthru
      _
    // Predicated region
    $region6: #{tpu_custom_call.1} parent=1 // pred_check
      _
    $region7: #{tpu_custom_call.1} parent=1 // pred_check_branch
      %27 = sbr.rel (0) target = $region9
    $region8: #{tpu_custom_call.1} parent=1 // pred_region
      %s29 = ssub.s32 3072, 3072
      %30 = vsyncadd [#allocation7], %s29
      %s31 = sshll.u32 [#allocation6], 4
      %s32 = int_to_ptr.vmem [resolvable:$true] %s31
      %37 = dma.hbm_to_vmem [thread:$0]  %s1, 3072, %s32, [#allocation7], 128, 128, 8
    $region9: #{tpu_custom_call.1} parent=1 // pred_fallthru
      _
    // Predicated region
    $region10: #{tpu_custom_call.1} parent=1 // pred_check
      _
    $region11: #{tpu_custom_call.1} parent=1 // pred_check_branch
      %39 = sbr.rel (0) target = $region13
    $region12: #{tpu_custom_call.1} parent=1 // pred_region
      _
    $region13: #{tpu_custom_call.1} parent=1 // pred_fallthru
      _
    // Predicated region
    $region14: #{tpu_custom_call.1} parent=1 // pred_check
      _
    $region15: #{tpu_custom_call.1} parent=1 // pred_check_branch
      %41 = sbr.rel (0) target = $region17
    $region16: #{tpu_custom_call.1} parent=1 // pred_region
      _
    $region17: #{tpu_custom_call.1} parent=1 // pred_fallthru
      _
    // Predicated region
    $region18: #{tpu_custom_call.1} parent=1 // pred_check
      _
    $region19: #{tpu_custom_call.1} parent=1 // pred_check_branch
      %43 = sbr.rel (0) target = $region21
    $region20: #{tpu_custom_call.1} parent=1 // pred_region
      _
    $region21: #{tpu_custom_call.1} parent=1 // pred_fallthru
      _
    // Predicated region
    $region22: #{tpu_custom_call.1} parent=1 // pred_check
      _
    $region23: #{tpu_custom_call.1} parent=1 // pred_check_branch
      %45 = sbr.rel (0) target = $region25
    $region24: #{tpu_custom_call.1} parent=1 // pred_region
      %s47 = ssub.s32 2048, 2048
      %48 = vsyncadd [#allocation7], %s47
      %s49 = sshll.u32 [#allocation8], 4
      %s50 = int_to_ptr.vmem [resolvable:$true] %s49
      %55 = dma.hbm_to_vmem [thread:$0]  %s5, 2048, %s50, [#allocation7], 128, 128, 8
    $region25: #{tpu_custom_call.1} parent=1 // pred_fallthru
      _
    // Predicated region
    $region26: #{tpu_custom_call.1} parent=1 // pred_check
      _
    $region27: #{tpu_custom_call.1} parent=1 // pred_check_branch
      %57 = sbr.rel (0) target = $region29
    $region28: #{tpu_custom_call.1} parent=1 // pred_region
      %58 = dma.done [#allocation4], 512
    $region29: #{tpu_custom_call.1} parent=1 // pred_fallthru
      _
    // Predicated region
    $region30: #{tpu_custom_call.1} parent=1 // pred_check
      _
    $region31: #{tpu_custom_call.1} parent=1 // pred_check_branch
      %60 = sbr.rel (0) target = $region33
    $region32: #{tpu_custom_call.1} parent=1 // pred_region
      %61 = dma.done [#allocation7], 3072
    $region33: #{tpu_custom_call.1} parent=1 // pred_fallthru
      _
    // Predicated region
    $region34: #{tpu_custom_call.1} parent=1 // pred_check
      _
    $region35: #{tpu_custom_call.1} parent=1 // pred_check_branch
      %63 = sbr.rel (0) target = $region37
    $region36: #{tpu_custom_call.1} parent=1 // pred_region
      %64 = dma.done [#allocation7], 2048
    $region37: #{tpu_custom_call.1} parent=1 // pred_fallthru
      _
    %vm65 = vcmask 523264
    %66 = vst.msk [vmem:[#allocation2] sm:$0xff] %vm65, 0.0
    %67 = vst.msk [vmem:[#allocation2 + $0x8] sm:$0xff] %vm65, 0.0
    %vm68 = vcmask 517120
    %69 = vst.msk [vmem:[#allocation2 + $0x10] sm:$0x3] %vm68, 0.0
    %70 = vst.msk [vmem:[#allocation2 + $0x18] sm:$0xff] %vm65, 0.0
    %71 = vst.msk [vmem:[#allocation2 + $0x20] sm:$0xff] %vm65, 0.0
    %72 = vst.msk [vmem:[#allocation2 + $0x28] sm:$0x3] %vm68, 0.0
    %v73 = vld [vmem:[#allocation3] sm:$0xff]
    %v74 = vld [vmem:[#allocation3 + $0x8] sm:$0xff]
    %v75 = vld [vmem:[#allocation3 + $0x10] sm:$0xff]
    %v76 = vld [vmem:[#allocation3 + $0x18] sm:$0xff]
    %77 = vst.msk [vmem:[#allocation2 + $0x1] sm:$0xff] %vm65, %v73
    %78 = vst.msk [vmem:[#allocation2 + $0x9] sm:$0xff] %vm65, %v74
    %79 = vst.msk [vmem:[#allocation2 + $0x19] sm:$0xff] %vm65, %v75
    %80 = vst.msk [vmem:[#allocation2 + $0x21] sm:$0xff] %vm65, %v76
    %v81 = vld [vmem:[%s2] sm:$0x1]
    %v83 = vlaneseq
    %v84 = vshrl.u32 %v83, 7
    %v85 = vsub.s32 0, %v84
    %v86 = vrot.slane %v81, %v85
    %v88 = vld [vmem:[#allocation2] sm:$0xff]
    %v89 = vld [vmem:[#allocation2 + $0x8] sm:$0xff]
    %v90 = vld [vmem:[#allocation2 + $0x18] sm:$0xff]
    %v91 = vld [vmem:[#allocation2 + $0x20] sm:$0xff]
    %v92 = vld [vmem:[#allocation6] sm:$0xff]
    %v93 = vld [vmem:[#allocation6 + $0x8] sm:$0xff]
    %v94 = vld [vmem:[#allocation6 + $0x10] sm:$0xff]
    %v95 = vld [vmem:[#allocation6 + $0x18] sm:$0xff]
    %v96 = vld [vmem:[#allocation6 + $0x20] sm:$0xff]
    %v97 = vld [vmem:[#allocation6 + $0x28] sm:$0xff]
    %v98 = vld [vmem:[#allocation6 + $0x30] sm:$0xff]
    %v99 = vld [vmem:[#allocation6 + $0x38] sm:$0xff]
    %v101 = vsel %vm65, %v88, 0
    %v104 = vsel %vm65, %v89, 0
    %v107 = vsel %vm65, %v90, 0
    %v110 = vsel %vm65, %v91, 0
    %112 = vmatprep.subr.mxu0 0.0
    %113 = vmatpush1.msra.mxu0 %v92
    %114 = vmatprep.subr.mxu0 0.0
    %115 = vmatpush1.msra.mxu0 %v93
    %116 = vmatprep.subr.mxu0 0.0
    %117 = vmatpush1.msra.mxu0 %v94
    %118 = vmatprep.subr.mxu0 0.0
    %119 = vmatpush1.msra.mxu0 %v95
    %120 = vmatprep.subr.mxu0 0.0
    %121 = vmatpush1.msra.mxu0 %v96
    %122 = vmatprep.subr.mxu0 0.0
    %123 = vmatpush1.msra.mxu0 %v97
    %124 = vmatprep.subr.mxu0 0.0
    %125 = vmatpush1.msra.mxu0 %v98
    %126 = vmatprep.subr.mxu0 0.0
    %127 = vmatpush1.msra.mxu0 %v99
    %128 = vmatprep.subr.mxu0 0.0
    %129 = vmatpush1.msra.mxu0 0.0
    %130 = vmatprep.subr.mxu0 0.0
    %131 = vmatpush1.msra.mxu0 0.0
    %132 = vmatprep.subr.mxu0 0.0
    %133 = vmatpush1.msra.mxu0 0.0
    %134 = vmatprep.subr.mxu0 0.0
    %135 = vmatpush1.msra.mxu0 0.0
    %136 = vmatprep.subr.mxu0 0.0
    %137 = vmatpush1.msra.mxu0 0.0
    %138 = vmatprep.subr.mxu0 0.0
    %139 = vmatpush1.msra.mxu0 0.0
    %140 = vmatprep.subr.mxu0 0.0
    %141 = vmatpush1.msra.mxu0 0.0
    %142 = vmatprep.subr.mxu0 0.0
    %143 = vmatpush1.msra.mxu0 0.0
    %144 = vmatprep.subr.mxu0 0.0
    %145 = vmatpush1.msra.mxu0 0.0
    %146 = vmatprep.subr.mxu0 0.0
    %147 = vmatpush1.msra.mxu0 0.0
    %148 = vmatprep.subr.mxu0 0.0
    %149 = vmatpush1.msra.mxu0 0.0
    %150 = vmatprep.subr.mxu0 0.0
    %151 = vmatpush1.msra.mxu0 0.0
    %152 = vmatprep.subr.mxu0 0.0
    %153 = vmatpush1.msra.mxu0 0.0
    %154 = vmatprep.subr.mxu0 0.0
    %155 = vmatpush1.msra.mxu0 0.0
    %156 = vmatprep.subr.mxu0 0.0
    %157 = vmatpush1.msra.mxu0 0.0
    %158 = vmatprep.subr.mxu0 0.0
    %159 = vmatpush1.msra.mxu0 0.0
    %160 = vmatprep.subr.mxu0 0.0
    %161 = vmatpush1.msra.mxu0 0.0
    %162 = vmatprep.subr.mxu0 0.0
    %163 = vmatpush1.msra.mxu0 0.0
    %164 = vmatprep.subr.mxu0 0.0
    %165 = vmatpush1.msra.mxu0 0.0
    %166 = vmatprep.subr.mxu0 0.0
    %167 = vmatpush1.msra.mxu0 0.0
    %168 = vmatprep.subr.mxu0 0.0
    %169 = vmatpush1.msra.mxu0 0.0
    %170 = vmatprep.subr.mxu0 0.0
    %171 = vmatpush1.msra.mxu0 0.0
    %172 = vmatprep.subr.mxu0 0.0
    %173 = vmatpush1.msra.mxu0 0.0
    %174 = vmatprep.subr.mxu0 0.0
    %175 = vmatpush1.msra.mxu0 0.0
    %176 = vmatprep.mubr.f32.mxu0 0.0
    %177 = vmatmul.mubr.f32.gmra.mrb[0].mxu0 %v101
    %v178 = vpop.f32.mrb[0].mxu0
    %v179 = vadd.f32 0.0, %v178
    %v180 = vpop.f32.mrb[0].mxu0
    %181 = vmatprep.mubr.f32.mxu0 0.0
    %182 = vmatmul.mubr.f32.gmra.mrb[0].mxu0 %v104
    %v183 = vpop.f32.mrb[0].mxu0
    %v184 = vadd.f32 0.0, %v183
    %v185 = vpop.f32.mrb[0].mxu0
    %186 = vmatprep.mubr.f32.mxu0 0.0
    %187 = vmatmul.mubr.f32.gmra.mrb[0].mxu0 %v107
    %v188 = vpop.f32.mrb[0].mxu0
    %v189 = vadd.f32 0.0, %v188
    %v190 = vpop.f32.mrb[0].mxu0
    %191 = vmatprep.mubr.f32.mxu0 0.0
    %192 = vmatmul.mubr.f32.gmra.mrb[0].mxu0 %v110
    %v193 = vpop.f32.mrb[0].mxu0
    %v194 = vadd.f32 0.0, %v193
    %v195 = vpop.f32.mrb[0].mxu0
    %196 = vdwg.mxu0
    %v197 = vadd.f32 %v86, %v179
    %v198 = vadd.f32 %v86, %v184
    %v199 = vadd.f32 %v86, %v189
    %v200 = vadd.f32 %v86, %v194
    %v201 = vld [vmem:[#allocation2 + $0x1] sm:$0xff]
    %v202 = vld [vmem:[#allocation2 + $0x9] sm:$0xff]
    %v203 = vld [vmem:[#allocation2 + $0x19] sm:$0xff]
    %v204 = vld [vmem:[#allocation2 + $0x21] sm:$0xff]
    %s205 = scalar_lea.vmem [#allocation6], 64
    %v206 = vld [vmem:[%s205] sm:$0xff]
    %v207 = vld [vmem:[%s205 + $0x8] sm:$0xff]
    %v208 = vld [vmem:[%s205 + $0x10] sm:$0xff]
    %v209 = vld [vmem:[%s205 + $0x18] sm:$0xff]
    %v210 = vld [vmem:[%s205 + $0x20] sm:$0xff]
    %v211 = vld [vmem:[%s205 + $0x28] sm:$0xff]
    %v212 = vld [vmem:[%s205 + $0x30] sm:$0xff]
    %v213 = vld [vmem:[%s205 + $0x38] sm:$0xff]
    %v215 = vsel %vm65, %v201, 0
    %v218 = vsel %vm65, %v202, 0
    %v221 = vsel %vm65, %v203, 0
    %v224 = vsel %vm65, %v204, 0
    %226 = vmatprep.subr.mxu0 0.0
    %227 = vmatpush1.msra.mxu0 %v206
    %228 = vmatprep.subr.mxu0 0.0
    %229 = vmatpush1.msra.mxu0 %v207
    %230 = vmatprep.subr.mxu0 0.0
    %231 = vmatpush1.msra.mxu0 %v208
    %232 = vmatprep.subr.mxu0 0.0
    %233 = vmatpush1.msra.mxu0 %v209
    %234 = vmatprep.subr.mxu0 0.0
    %235 = vmatpush1.msra.mxu0 %v210
    %236 = vmatprep.subr.mxu0 0.0
    %237 = vmatpush1.msra.mxu0 %v211
    %238 = vmatprep.subr.mxu0 0.0
    %239 = vmatpush1.msra.mxu0 %v212
    %240 = vmatprep.subr.mxu0 0.0
    %241 = vmatpush1.msra.mxu0 %v213
    %242 = vmatprep.subr.mxu0 0.0
    %243 = vmatpush1.msra.mxu0 0.0
    %244 = vmatprep.subr.mxu0 0.0
    %245 = vmatpush1.msra.mxu0 0.0
    %246 = vmatprep.subr.mxu0 0.0
    %247 = vmatpush1.msra.mxu0 0.0
    %248 = vmatprep.subr.mxu0 0.0
    %249 = vmatpush1.msra.mxu0 0.0
    %250 = vmatprep.subr.mxu0 0.0
    %251 = vmatpush1.msra.mxu0 0.0
    %252 = vmatprep.subr.mxu0 0.0
    %253 = vmatpush1.msra.mxu0 0.0
    %254 = vmatprep.subr.mxu0 0.0
    %255 = vmatpush1.msra.mxu0 0.0
    %256 = vmatprep.subr.mxu0 0.0
    %257 = vmatpush1.msra.mxu0 0.0
    %258 = vmatprep.subr.mxu0 0.0
    %259 = vmatpush1.msra.mxu0 0.0
    %260 = vmatprep.subr.mxu0 0.0
    %261 = vmatpush1.msra.mxu0 0.0
    %262 = vmatprep.subr.mxu0 0.0
    %263 = vmatpush1.msra.mxu0 0.0
    %264 = vmatprep.subr.mxu0 0.0
    %265 = vmatpush1.msra.mxu0 0.0
    %266 = vmatprep.subr.mxu0 0.0
    %267 = vmatpush1.msra.mxu0 0.0
    %268 = vmatprep.subr.mxu0 0.0
    %269 = vmatpush1.msra.mxu0 0.0
    %270 = vmatprep.subr.mxu0 0.0
    %271 = vmatpush1.msra.mxu0 0.0
    %272 = vmatprep.subr.mxu0 0.0
    %273 = vmatpush1.msra.mxu0 0.0
    %274 = vmatprep.subr.mxu0 0.0
    %275 = vmatpush1.msra.mxu0 0.0
    %276 = vmatprep.subr.mxu0 0.0
    %277 = vmatpush1.msra.mxu0 0.0
    %278 = vmatprep.subr.mxu0 0.0
    %279 = vmatpush1.msra.mxu0 0.0
    %280 = vmatprep.subr.mxu0 0.0
    %281 = vmatpush1.msra.mxu0 0.0
    %282 = vmatprep.subr.mxu0 0.0
    %283 = vmatpush1.msra.mxu0 0.0
    %284 = vmatprep.subr.mxu0 0.0
    %285 = vmatpush1.msra.mxu0 0.0
    %286 = vmatprep.subr.mxu0 0.0
    %287 = vmatpush1.msra.mxu0 0.0
    %288 = vmatprep.subr.mxu0 0.0
    %289 = vmatpush1.msra.mxu0 0.0
    %290 = vmatprep.mubr.f32.mxu0 0.0
    %291 = vmatmul.mubr.f32.gmra.mrb[0].mxu0 %v215
    %v292 = vpop.f32.mrb[0].mxu0
    %v293 = vadd.f32 0.0, %v292
    %v294 = vpop.f32.mrb[0].mxu0
    %295 = vmatprep.mubr.f32.mxu0 0.0
    %296 = vmatmul.mubr.f32.gmra.mrb[0].mxu0 %v218
    %v297 = vpop.f32.mrb[0].mxu0
    %v298 = vadd.f32 0.0, %v297
    %v299 = vpop.f32.mrb[0].mxu0
    %300 = vmatprep.mubr.f32.mxu0 0.0
    %301 = vmatmul.mubr.f32.gmra.mrb[0].mxu0 %v221
    %v302 = vpop.f32.mrb[0].mxu0
    %v303 = vadd.f32 0.0, %v302
    %v304 = vpop.f32.mrb[0].mxu0
    %305 = vmatprep.mubr.f32.mxu0 0.0
    %306 = vmatmul.mubr.f32.gmra.mrb[0].mxu0 %v224
    %v307 = vpop.f32.mrb[0].mxu0
    %v308 = vadd.f32 0.0, %v307
    %v309 = vpop.f32.mrb[0].mxu0
    %310 = vdwg.mxu0
    %v311 = vadd.f32 %v197, %v293
    %v312 = vadd.f32 %v198, %v298
    %v313 = vadd.f32 %v199, %v303
    %v314 = vadd.f32 %v200, %v308
    %v315 = vld [vmem:[#allocation2 + $0x2] sm:$0xff]
    %v316 = vld [vmem:[#allocation2 + $0xa] sm:$0xff]
    %v317 = vld [vmem:[#allocation2 + $0x1a] sm:$0xff]
    %v318 = vld [vmem:[#allocation2 + $0x22] sm:$0xff]
    %s319 = scalar_lea.vmem [#allocation6], 128
    %v320 = vld [vmem:[%s319] sm:$0xff]
    %v321 = vld [vmem:[%s319 + $0x8] sm:$0xff]
    %v322 = vld [vmem:[%s319 + $0x10] sm:$0xff]
    %v323 = vld [vmem:[%s319 + $0x18] sm:$0xff]
    %v324 = vld [vmem:[%s319 + $0x20] sm:$0xff]
    %v325 = vld [vmem:[%s319 + $0x28] sm:$0xff]
    %v326 = vld [vmem:[%s319 + $0x30] sm:$0xff]
    %v327 = vld [vmem:[%s319 + $0x38] sm:$0xff]
    %v329 = vsel %vm65, %v315, 0
    %v332 = vsel %vm65, %v316, 0
    %v335 = vsel %vm65, %v317, 0
    %v338 = vsel %vm65, %v318, 0
    %340 = vmatprep.subr.mxu0 0.0
    %341 = vmatpush1.msra.mxu0 %v320
    %342 = vmatprep.subr.mxu0 0.0
    %343 = vmatpush1.msra.mxu0 %v321
    %344 = vmatprep.subr.mxu0 0.0
    %345 = vmatpush1.msra.mxu0 %v322
    %346 = vmatprep.subr.mxu0 0.0
    %347 = vmatpush1.msra.mxu0 %v323
    %348 = vmatprep.subr.mxu0 0.0
    %349 = vmatpush1.msra.mxu0 %v324
    %350 = vmatprep.subr.mxu0 0.0
    %351 = vmatpush1.msra.mxu0 %v325
    %352 = vmatprep.subr.mxu0 0.0
    %353 = vmatpush1.msra.mxu0 %v326
    %354 = vmatprep.subr.mxu0 0.0
    %355 = vmatpush1.msra.mxu0 %v327
    %356 = vmatprep.subr.mxu0 0.0
    %357 = vmatpush1.msra.mxu0 0.0
    %358 = vmatprep.subr.mxu0 0.0
    %359 = vmatpush1.msra.mxu0 0.0
    %360 = vmatprep.subr.mxu0 0.0
    %361 = vmatpush1.msra.mxu0 0.0
    %362 = vmatprep.subr.mxu0 0.0
    %363 = vmatpush1.msra.mxu0 0.0
    %364 = vmatprep.subr.mxu0 0.0
    %365 = vmatpush1.msra.mxu0 0.0
    %366 = vmatprep.subr.mxu0 0.0
    %367 = vmatpush1.msra.mxu0 0.0
    %368 = vmatprep.subr.mxu0 0.0
    %369 = vmatpush1.msra.mxu0 0.0
    %370 = vmatprep.subr.mxu0 0.0
    %371 = vmatpush1.msra.mxu0 0.0
    %372 = vmatprep.subr.mxu0 0.0
    %373 = vmatpush1.msra.mxu0 0.0
    %374 = vmatprep.subr.mxu0 0.0
    %375 = vmatpush1.msra.mxu0 0.0
    %376 = vmatprep.subr.mxu0 0.0
    %377 = vmatpush1.msra.mxu0 0.0
    %378 = vmatprep.subr.mxu0 0.0
    %379 = vmatpush1.msra.mxu0 0.0
    %380 = vmatprep.subr.mxu0 0.0
    %381 = vmatpush1.msra.mxu0 0.0
    %382 = vmatprep.subr.mxu0 0.0
    %383 = vmatpush1.msra.mxu0 0.0
    %384 = vmatprep.subr.mxu0 0.0
    %385 = vmatpush1.msra.mxu0 0.0
    %386 = vmatprep.subr.mxu0 0.0
    %387 = vmatpush1.msra.mxu0 0.0
    %388 = vmatprep.subr.mxu0 0.0
    %389 = vmatpush1.msra.mxu0 0.0
    %390 = vmatprep.subr.mxu0 0.0
    %391 = vmatpush1.msra.mxu0 0.0
    %392 = vmatprep.subr.mxu0 0.0
    %393 = vmatpush1.msra.mxu0 0.0
    %394 = vmatprep.subr.mxu0 0.0
    %395 = vmatpush1.msra.mxu0 0.0
    %396 = vmatprep.subr.mxu0 0.0
    %397 = vmatpush1.msra.mxu0 0.0
    %398 = vmatprep.subr.mxu0 0.0
    %399 = vmatpush1.msra.mxu0 0.0
    %400 = vmatprep.subr.mxu0 0.0
    %401 = vmatpush1.msra.mxu0 0.0
    %402 = vmatprep.subr.mxu0 0.0
    %403 = vmatpush1.msra.mxu0 0.0
    %404 = vmatprep.mubr.f32.mxu0 0.0
    %405 = vmatmul.mubr.f32.gmra.mrb[0].mxu0 %v329
    %v406 = vpop.f32.mrb[0].mxu0
    %v407 = vadd.f32 0.0, %v406
    %v408 = vpop.f32.mrb[0].mxu0
    %409 = vmatprep.mubr.f32.mxu0 0.0
    %410 = vmatmul.mubr.f32.gmra.mrb[0].mxu0 %v332
    %v411 = vpop.f32.mrb[0].mxu0
    %v412 = vadd.f32 0.0, %v411
    %v413 = vpop.f32.mrb[0].mxu0
    %414 = vmatprep.mubr.f32.mxu0 0.0
    %415 = vmatmul.mubr.f32.gmra.mrb[0].mxu0 %v335
    %v416 = vpop.f32.mrb[0].mxu0
    %v417 = vadd.f32 0.0, %v416
    %v418 = vpop.f32.mrb[0].mxu0
    %419 = vmatprep.mubr.f32.mxu0 0.0
    %420 = vmatmul.mubr.f32.gmra.mrb[0].mxu0 %v338
    %v421 = vpop.f32.mrb[0].mxu0
    %v422 = vadd.f32 0.0, %v421
    %v423 = vpop.f32.mrb[0].mxu0
    %424 = vdwg.mxu0
    %v425 = vadd.f32 %v311, %v407
    %v426 = vadd.f32 %v312, %v412
    %v427 = vadd.f32 %v313, %v417
    %v428 = vadd.f32 %v314, %v422
    %v429 = vadd.f32 %v425, %v426
    %v430 = vadd.f32 %v429, %v427
    %v431 = vadd.f32 %v430, %v428
    %v432 = vrot.slane %v431, 4
    %v433 = vadd.f32 %v431, %v432
    %v434 = vrot.slane %v433, 2
    %v435 = vadd.f32 %v433, %v434
    %v436 = vrot.slane %v435, 1
    %v437 = vadd.f32 %v435, %v436
    %v438 = vmul.f32 %v425, %v425
    %v439 = vmul.f32 %v426, %v426
    %v440 = vmul.f32 %v427, %v427
    %v441 = vmul.f32 %v428, %v428
    %v442 = vadd.f32 %v438, %v439
    %v443 = vadd.f32 %v442, %v440
    %v444 = vadd.f32 %v443, %v441
    %v445 = vrot.slane %v444, 4
    %v446 = vadd.f32 %v444, %v445
    %v447 = vrot.slane %v446, 2
    %v448 = vadd.f32 %v446, %v447
    %v449 = vrot.slane %v448, 1
    %v450 = vadd.f32 %v448, %v449
    %v451 = vld [vmem:[#allocation8] sm:$0xff]
    %v452 = vld [vmem:[#allocation8 + $0x8] sm:$0xff]
    %v453 = vld [vmem:[#allocation8 + $0x10] sm:$0xff]
    %v454 = vld [vmem:[#allocation8 + $0x18] sm:$0xff]
    %v455 = vld [vmem:[#allocation8 + $0x20] sm:$0xff]
    %v456 = vld [vmem:[#allocation8 + $0x28] sm:$0xff]
    %v457 = vld [vmem:[#allocation8 + $0x30] sm:$0xff]
    %v458 = vld [vmem:[#allocation8 + $0x38] sm:$0xff]
    %v459 = vld [vmem:[#allocation8 + $0x40] sm:$0xff]
    %v460 = vld [vmem:[#allocation8 + $0x48] sm:$0xff]
    %v461 = vld [vmem:[#allocation8 + $0x50] sm:$0xff]
    %v462 = vld [vmem:[#allocation8 + $0x58] sm:$0xff]
    %v463 = vld [vmem:[#allocation8 + $0x60] sm:$0xff]
    %v464 = vld [vmem:[#allocation8 + $0x68] sm:$0xff]
    %v465 = vld [vmem:[#allocation8 + $0x70] sm:$0xff]
    %v466 = vld [vmem:[#allocation8 + $0x78] sm:$0xff]
    %467 = vmatprep.subr.mxu0 0.0
    %468 = vmatpush1.msra.mxu0 %v451
    %469 = vmatprep.subr.mxu0 0.0
    %470 = vmatpush1.msra.mxu0 %v452
    %471 = vmatprep.subr.mxu0 0.0
    %472 = vmatpush1.msra.mxu0 %v453
    %473 = vmatprep.subr.mxu0 0.0
    %474 = vmatpush1.msra.mxu0 %v454
    %475 = vmatprep.subr.mxu0 0.0
    %476 = vmatpush1.msra.mxu0 %v455
    %477 = vmatprep.subr.mxu0 0.0
    %478 = vmatpush1.msra.mxu0 %v456
    %479 = vmatprep.subr.mxu0 0.0
    %480 = vmatpush1.msra.mxu0 %v457
    %481 = vmatprep.subr.mxu0 0.0
    %482 = vmatpush1.msra.mxu0 %v458
    %483 = vmatprep.subr.mxu0 0.0
    %484 = vmatpush1.msra.mxu0 %v459
    %485 = vmatprep.subr.mxu0 0.0
    %486 = vmatpush1.msra.mxu0 %v460
    %487 = vmatprep.subr.mxu0 0.0
    %488 = vmatpush1.msra.mxu0 %v461
    %489 = vmatprep.subr.mxu0 0.0
    %490 = vmatpush1.msra.mxu0 %v462
    %491 = vmatprep.subr.mxu0 0.0
    %492 = vmatpush1.msra.mxu0 %v463
    %493 = vmatprep.subr.mxu0 0.0
    %494 = vmatpush1.msra.mxu0 %v464
    %495 = vmatprep.subr.mxu0 0.0
    %496 = vmatpush1.msra.mxu0 %v465
    %497 = vmatprep.subr.mxu0 0.0
    %498 = vmatpush1.msra.mxu0 %v466
    %499 = vmatprep.subr.mxu0 0.0
    %500 = vmatpush1.msra.mxu0 0.0
    %501 = vmatprep.subr.mxu0 0.0
    %502 = vmatpush1.msra.mxu0 0.0
    %503 = vmatprep.subr.mxu0 0.0
    %504 = vmatpush1.msra.mxu0 0.0
    %505 = vmatprep.subr.mxu0 0.0
    %506 = vmatpush1.msra.mxu0 0.0
    %507 = vmatprep.subr.mxu0 0.0
    %508 = vmatpush1.msra.mxu0 0.0
    %509 = vmatprep.subr.mxu0 0.0
    %510 = vmatpush1.msra.mxu0 0.0
    %511 = vmatprep.subr.mxu0 0.0
    %512 = vmatpush1.msra.mxu0 0.0
    %513 = vmatprep.subr.mxu0 0.0
    %514 = vmatpush1.msra.mxu0 0.0
    %515 = vmatprep.subr.mxu0 0.0
    %516 = vmatpush1.msra.mxu0 0.0
    %517 = vmatprep.subr.mxu0 0.0
    %518 = vmatpush1.msra.mxu0 0.0
    %519 = vmatprep.subr.mxu0 0.0
    %520 = vmatpush1.msra.mxu0 0.0
    %521 = vmatprep.subr.mxu0 0.0
    %522 = vmatpush1.msra.mxu0 0.0
    %523 = vmatprep.subr.mxu0 0.0
    %524 = vmatpush1.msra.mxu0 0.0
    %525 = vmatprep.subr.mxu0 0.0
    %526 = vmatpush1.msra.mxu0 0.0
    %527 = vmatprep.subr.mxu0 0.0
    %528 = vmatpush1.msra.mxu0 0.0
    %529 = vmatprep.subr.mxu0 0.0
    %530 = vmatpush1.msra.mxu0 0.0
    %531 = vmatprep.mubr.f32.mxu0 0.0
    %532 = vmatmul.mubr.f32.gmra.mrb[0].mxu0 %v437
    %v533 = vpop.f32.mrb[0].mxu0
    %v534 = vadd.f32 0.0, %v533
    %v535 = vpop.f32.mrb[0].mxu0
    %536 = vdwg.mxu0
    %v537 = vmul.f32 %v534, 0.001953125
    %538 = vmatprep.subr.mxu0 0.0
    %539 = vmatpush1.msra.mxu0 %v451
    %540 = vmatprep.subr.mxu0 0.0
    %541 = vmatpush1.msra.mxu0 %v452
    %542 = vmatprep.subr.mxu0 0.0
    %543 = vmatpush1.msra.mxu0 %v453
    %544 = vmatprep.subr.mxu0 0.0
    %545 = vmatpush1.msra.mxu0 %v454
    %546 = vmatprep.subr.mxu0 0.0
    %547 = vmatpush1.msra.mxu0 %v455
    %548 = vmatprep.subr.mxu0 0.0
    %549 = vmatpush1.msra.mxu0 %v456
    %550 = vmatprep.subr.mxu0 0.0
    %551 = vmatpush1.msra.mxu0 %v457
    %552 = vmatprep.subr.mxu0 0.0
    %553 = vmatpush1.msra.mxu0 %v458
    %554 = vmatprep.subr.mxu0 0.0
    %555 = vmatpush1.msra.mxu0 %v459
    %556 = vmatprep.subr.mxu0 0.0
    %557 = vmatpush1.msra.mxu0 %v460
    %558 = vmatprep.subr.mxu0 0.0
    %559 = vmatpush1.msra.mxu0 %v461
    %560 = vmatprep.subr.mxu0 0.0
    %561 = vmatpush1.msra.mxu0 %v462
    %562 = vmatprep.subr.mxu0 0.0
    %563 = vmatpush1.msra.mxu0 %v463
    %564 = vmatprep.subr.mxu0 0.0
    %565 = vmatpush1.msra.mxu0 %v464
    %566 = vmatprep.subr.mxu0 0.0
    %567 = vmatpush1.msra.mxu0 %v465
    %568 = vmatprep.subr.mxu0 0.0
    %569 = vmatpush1.msra.mxu0 %v466
    %570 = vmatprep.subr.mxu0 0.0
    %571 = vmatpush1.msra.mxu0 0.0
    %572 = vmatprep.subr.mxu0 0.0
    %573 = vmatpush1.msra.mxu0 0.0
    %574 = vmatprep.subr.mxu0 0.0
    %575 = vmatpush1.msra.mxu0 0.0
    %576 = vmatprep.subr.mxu0 0.0
    %577 = vmatpush1.msra.mxu0 0.0
    %578 = vmatprep.subr.mxu0 0.0
    %579 = vmatpush1.msra.mxu0 0.0
    %580 = vmatprep.subr.mxu0 0.0
    %581 = vmatpush1.msra.mxu0 0.0
    %582 = vmatprep.subr.mxu0 0.0
    %583 = vmatpush1.msra.mxu0 0.0
    %584 = vmatprep.subr.mxu0 0.0
    %585 = vmatpush1.msra.mxu0 0.0
    %586 = vmatprep.subr.mxu0 0.0
    %587 = vmatpush1.msra.mxu0 0.0
    %588 = vmatprep.subr.mxu0 0.0
    %589 = vmatpush1.msra.mxu0 0.0
    %590 = vmatprep.subr.mxu0 0.0
    %591 = vmatpush1.msra.mxu0 0.0
    %592 = vmatprep.subr.mxu0 0.0
    %593 = vmatpush1.msra.mxu0 0.0
    %594 = vmatprep.subr.mxu0 0.0
    %595 = vmatpush1.msra.mxu0 0.0
    %596 = vmatprep.subr.mxu0 0.0
    %597 = vmatpush1.msra.mxu0 0.0
    %598 = vmatprep.subr.mxu0 0.0
    %599 = vmatpush1.msra.mxu0 0.0
    %600 = vmatprep.subr.mxu0 0.0
    %601 = vmatpush1.msra.mxu0 0.0
    %602 = vmatprep.mubr.f32.mxu0 0.0
    %603 = vmatmul.mubr.f32.gmra.mrb[0].mxu0 %v450
    %v604 = vpop.f32.mrb[0].mxu0
    %v605 = vadd.f32 0.0, %v604
    %v606 = vpop.f32.mrb[0].mxu0
    %607 = vdwg.mxu0
    %v608 = vmul.f32 %v605, 0.001953125
    %v609 = vmul.f32 %v537, %v537
    %v610 = vsub.f32 %v608, %v609
    %v611 = vadd.f32 %v610, 1e-05
    %v612 = vrsqrt.pop %v611
    %v613 = vlaneseq
    %v614 = vshrl.u32 %v613, 7
    %v615 = vsub.s32 0, %v614
    %v616 = vrot.slane %v537, %v615
    %v617 = vsub.f32 %v425, %v616
    %v618 = vsub.f32 %v426, %v616
    %v619 = vsub.f32 %v427, %v616
    %v620 = vsub.f32 %v428, %v616
    %v621 = vld [vmem:[%s3] sm:$0x1]
    %v622 = vmul.f32 %v612, %v621
    %v623 = vlaneseq
    %v624 = vshrl.u32 %v623, 7
    %v625 = vsub.s32 0, %v624
    %v626 = vrot.slane %v622, %v625
    %v627 = vmul.f32 %v617, %v626
    %v628 = vmul.f32 %v618, %v626
    %v629 = vmul.f32 %v619, %v626
    %v630 = vmul.f32 %v620, %v626
    %v631 = vld [vmem:[%s4] sm:$0x1]
    %v633 = vlaneseq
    %v634 = vshrl.u32 %v633, 7
    %v635 = vsub.s32 0, %v634
    %v636 = vrot.slane %v631, %v635
    %v638 = vadd.f32 %v627, %v636
    %v639 = vadd.f32 %v628, %v636
    %v640 = vadd.f32 %v629, %v636
    %v641 = vadd.f32 %v630, %v636
    %v642 = vmax.f32 %v638, 0.0
    %v643 = vmax.f32 %v639, 0.0
    %v644 = vmax.f32 %v640, 0.0
    %v645 = vmax.f32 %v641, 0.0
    %646 = vst [vmem:[#allocation9] sm:$0xff] %v642
    %647 = vst [vmem:[#allocation9 + $0x8] sm:$0xff] %v643
    %648 = vst [vmem:[#allocation9 + $0x10] sm:$0xff] %v644
    %649 = vst [vmem:[#allocation9 + $0x18] sm:$0xff] %v645
    // Predicated region
    $region38: #{tpu_custom_call.1} parent=1 // pred_check
      _
    $region39: #{tpu_custom_call.1} parent=1 // pred_check_branch
      %651 = sbr.rel (0) target = $region41
    $region40: #{tpu_custom_call.1} parent=1 // pred_region
      %s653 = ssub.s32 512, 512
      %654 = vsyncadd [#allocation5], %s653
      %s655 = sshll.u32 [#allocation9], 4
      %s656 = int_to_ptr.vmem [resolvable:$true] %s655
      %661 = dma.vmem_to_hbm [thread:$0]  %s656, 512, %s6, [#allocation5], 128, 128, 8
    $region41: #{tpu_custom_call.1} parent=1 // pred_fallthru
      _
    // Predicated region
    $region42: #{tpu_custom_call.1} parent=1 // pred_check
      _
    $region43: #{tpu_custom_call.1} parent=1 // pred_check_branch
      %663 = sbr.rel (0) target = $region45
    $region44: #{tpu_custom_call.1} parent=1 // pred_region
      %664 = dma.done [#allocation5], 512
    $region45: #{tpu_custom_call.1} parent=1 // pred_fallthru
      _
    %665 = vsyncpa [#allocation4], 1
    %666 = vsyncpa [#allocation7], 1
    %667 = vsyncpa [#allocation5], 1

</llo_original>
